<compile_context>
chip_gen: v7x
topology: tpu7x:2x2x1
jax: 0.10.0
libtpu: 0.0.40
codegen_flags: <defaults>
</compile_context>

<pallas_src>
import functools

import jax
import jax.numpy as jnp
from jax.experimental import pallas as pl
from jax.experimental.pallas import tpu as pltpu


def _round_up(x, m):
    return ((x + m - 1) // m) * m


def _make_head_kernel(return_hidden):
    def kernel(cls_ref, wp_ref, bp_ref, w1_ref, b1_ref, w2_ref, b2_ref, *out_refs):
        # cls_ref: [tb, Hb] CLS-token hidden states (one batch tile, input dtype)
        # wp_ref:  [Hb, Hb] bf16, bp_ref: [1, Hb] f32     (BERT pooler dense)
        # w1_ref:  [Hb, H]  bf16, b1_ref: [1, H]  f32     (head layer 1)
        # w2_ref:  [H, Cp]  bf16, b2_ref: [1, Cp] f32     (head layer 2, lane-padded)
        #
        # NOTE: on a ragged edge tile, rows >= B in cls_ref hold stale VMEM; the
        # math below (matmul/tanh/add) cannot produce inf/nan from them and the
        # corresponding output rows are masked on writeback. Do not add ops
        # (exp/log/reductions across rows) that could leak garbage.
        logits_ref = out_refs[0]

        cls_bf16 = cls_ref[...].astype(jnp.bfloat16)  # no-op when input is bf16

        # BERT pooler: tanh(cls @ Wp + bp)  (bf16 MXU feed, f32 accumulate/elementwise)
        pooled = jnp.tanh(
            jnp.dot(cls_bf16, wp_ref[...], preferred_element_type=jnp.float32)
            + bp_ref[...]
        )

        # main_linear: Linear -> Tanh -> Linear
        h = jnp.tanh(
            jnp.dot(pooled.astype(jnp.bfloat16), w1_ref[...],
                    preferred_element_type=jnp.float32)
            + b1_ref[...]
        )
        logits = (
            jnp.dot(h.astype(jnp.bfloat16), w2_ref[...],
                    preferred_element_type=jnp.float32)
            + b2_ref[...]
        )

        logits_ref[...] = logits.astype(logits_ref.dtype)
        if return_hidden:
            out_refs[1][...] = pooled.astype(out_refs[1].dtype)

    return kernel


def prepare_head_params(params, lane=128):
    """One-time weight prep. Call ONCE (outside the per-step forward) and reuse.

    Casts MXU operands to bf16, keeps biases f32, and zero-pads the classifier
    output dim to a multiple of `lane` (lane-dense unmasked stores).
    Returns (prepared_dict, num_classes).
    """
    wp = jnp.asarray(params["wp"], jnp.bfloat16)
    w1 = jnp.asarray(params["w1"], jnp.bfloat16)
    w2 = jnp.asarray(params["w2"], jnp.bfloat16)
    bp = jnp.asarray(params["bp"], jnp.float32).reshape(1, -1)
    b1 = jnp.asarray(params["b1"], jnp.float32).reshape(1, -1)
    b2 = jnp.asarray(params["b2"], jnp.float32).reshape(1, -1)

    num_classes = w2.shape[1]
    cp = _round_up(num_classes, lane)
    if cp != num_classes:
        w2 = jnp.pad(w2, ((0, 0), (0, cp - num_classes)))
        b2 = jnp.pad(b2, ((0, 0), (0, cp - num_classes)))

    prepared = {"wp": wp, "bp": bp, "w1": w1, "b1": b1, "w2": w2, "b2": b2}
    return jax.device_put(prepared), num_classes


@functools.partial(jax.jit, static_argnames=("num_classes", "return_hidden"))
def text_classifier_no_aux(hidden_states, prepared, num_classes, return_hidden=False):
    """hidden_states: [B, S, H_bert] last BERT encoder layer output (synthetic).

    Returns (logits [B, C] f32, pooler_output [B, H_bert] in the activation
    dtype, or None) — matching the PyTorch module's forward signature.
    """
    B, S, Hb = hidden_states.shape
    act_dtype = hidden_states.dtype

    wp, bp = prepared["wp"], prepared["bp"]
    w1, b1 = prepared["w1"], prepared["b1"]
    w2, b2 = prepared["w2"], prepared["b2"]
    H = w1.shape[1]
    Cp = w2.shape[1]

    # Fused CLS extraction: view [B, S*Hb]; the CLS row of each batch element
    # occupies columns [0, Hb), so a (tb, Hb) block at column-block 0 DMAs only
    # the CLS token (strided HBM read, no separate slice op).
    # NOTE: assumes contiguous row-major [B, S, Hb]; a non-default layout would
    # make XLA materialize a copy before the reshape (perf hazard, not wrongness).
    if Hb % 128 == 0:
        x = hidden_states.reshape(B, S * Hb)
    else:
        x = hidden_states[:, 0, :]  # fallback: last dim == full dim is always legal

    # Batch tile. Small/moderate B: one grid step (weight-DMA-bound regime — a
    # second TC would only duplicate the resident-weight fetch). Large B: size
    # the tile so the grid has >= 2 steps, letting ("parallel",) shard the
    # batch across both v7x TensorCores; cap 1024 keeps VMEM well under the
    # 32 MiB default scoped limit even at Hb=768 with return_hidden=True.
    sub = 8 if jnp.dtype(act_dtype).itemsize == 4 else 16
    if B <= 512:
        tb = _round_up(B, sub)
    else:
        tb = min(1024, _round_up(-(-B // 2), sub))
    grid = (pl.cdiv(B, tb),)

    const = lambda i: (0, 0)
    resident = pl.Buffered(1)  # never re-fetched -> single VMEM buffer
    in_specs = [
        pl.BlockSpec((tb, Hb), lambda i: (i, 0)),                 # CLS acts (pipelined)
        pl.BlockSpec((Hb, Hb), const, pipeline_mode=resident),    # pooler W
        pl.BlockSpec((1, Hb), const, pipeline_mode=resident),     # pooler b
        pl.BlockSpec((Hb, H), const, pipeline_mode=resident),     # head W1
        pl.BlockSpec((1, H), const, pipeline_mode=resident),      # head b1
        pl.BlockSpec((H, Cp), const, pipeline_mode=resident),     # head W2 (lane-padded)
        pl.BlockSpec((1, Cp), const, pipeline_mode=resident),     # head b2 (lane-padded)
    ]

    logits_shape = jax.ShapeDtypeStruct((B, Cp), jnp.float32)
    logits_spec = pl.BlockSpec((tb, Cp), lambda i: (i, 0))
    if return_hidden:
        out_shape = (logits_shape, jax.ShapeDtypeStruct((B, Hb), act_dtype))
        out_specs = (logits_spec, pl.BlockSpec((tb, Hb), lambda i: (i, 0)))
    else:
        out_shape = logits_shape
        out_specs = logits_spec

    act_bytes = jnp.dtype(act_dtype).itemsize
    bytes_in = (
        B * Hb * act_bytes
        + (wp.size + w1.size + w2.size) * 2
        + (bp.size + b1.size + b2.size) * 4
    )
    bytes_out = B * Cp * 4 + (B * Hb * act_bytes if return_hidden else 0)
    cost = pl.CostEstimate(
        flops=2 * B * (Hb * Hb + Hb * H + H * Cp),
        transcendentals=B * (Hb + H),
        bytes_accessed=bytes_in + bytes_out,
    )

    out = pl.pallas_call(
        _make_head_kernel(return_hidden),
        out_shape=out_shape,
        grid=grid,
        in_specs=in_specs,
        out_specs=out_specs,
        compiler_params=pltpu.CompilerParams(
            dimension_semantics=("parallel",),  # batch tiles across TCs (v7x, large B)
        ),
        cost_estimate=cost,
    )(x, wp, bp, w1, b1, w2, b2)

    if return_hidden:
        logits_p, pooled = out
    else:
        logits_p, pooled = out, None

    # Keep this slice adjacent to the kernel: columns C..Cp of logits_p are the
    # zero padding and must never reach a consumer (e.g. argmax) unsliced.
    logits = logits_p if Cp == num_classes else logits_p[:, :num_classes]
    return logits, pooled


def init_params(key, h_bert, h_cfg, num_classes):
    """Raw (f32, PyTorch-like) parameters; prepare_head_params() does the one-time
    bf16 cast + lane padding."""
    ks = jax.random.split(key, 6)
    scale = 0.02
    return {
        "wp": scale * jax.random.normal(ks[0], (h_bert, h_bert), jnp.float32),
        "bp": scale * jax.random.normal(ks[1], (1, h_bert), jnp.float32),
        "w1": scale * jax.random.normal(ks[2], (h_bert, h_cfg), jnp.float32),
        "b1": scale * jax.random.normal(ks[3], (1, h_cfg), jnp.float32),
        "w2": scale * jax.random.normal(ks[4], (h_cfg, num_classes), jnp.float32),
        "b2": scale * jax.random.normal(ks[5], (1, num_classes), jnp.float32),
    }


if __name__ == "__main__":
    # Small, BERT-like shapes: batch=2, seq=8, bert_hidden=128,
    # config.hidden_size=32, num_classes=8.
    B, S, H_BERT, H_CFG, C = 2, 8, 128, 32, 8

    key = jax.random.PRNGKey(0)
    k_x, k_p = jax.random.split(key)
    # bf16 activations: matches how the preceding BERT stack would run on TPU
    # and halves the CLS / pooled HBM streams.
    hidden_states = jax.random.normal(k_x, (B, S, H_BERT), jnp.float32).astype(jnp.bfloat16)
    raw_params = init_params(k_p, H_BERT, H_CFG, C)

    # One-time weight prep (hoisted out of the per-call forward).
    prepared, num_classes = prepare_head_params(raw_params)

    # return_hidden=False path: single (logits-only) kernel variant.
    logits, hidden = text_classifier_no_aux(
        hidden_states, prepared, num_classes=num_classes, return_hidden=False)
    logits = jax.block_until_ready(logits)
    assert hidden is None
    assert logits.shape == (B, C)

    # return_hidden=True path: logits + pooler output (activation dtype).
    logits2, pooled = text_classifier_no_aux(
        hidden_states, prepared, num_classes=num_classes, return_hidden=True)
    pooled = jax.block_until_ready(pooled)
    assert pooled.shape == (B, H_BERT)
    assert pooled.dtype == hidden_states.dtype
    assert logits2.shape == (B, C)

    # Pure-JAX reference of the Pallas-implemented math (same bf16 MXU feeds,
    # f32 accumulation and f32 elementwise).
    cls = hidden_states[:, 0, :].astype(jnp.bfloat16)
    pooled_ref = jnp.tanh(
        jnp.dot(cls, prepared["wp"], preferred_element_type=jnp.float32)
        + prepared["bp"])
    h_ref = jnp.tanh(
        jnp.dot(pooled_ref.astype(jnp.bfloat16), prepared["w1"],
                preferred_element_type=jnp.float32) + prepared["b1"])
    logits_ref = (jnp.dot(h_ref.astype(jnp.bfloat16), prepared["w2"],
                          preferred_element_type=jnp.float32) + prepared["b2"])[:, :C]

    assert jnp.allclose(logits, logits_ref, atol=2e-3, rtol=2e-3)
    assert jnp.allclose(logits2, logits_ref, atol=2e-3, rtol=2e-3)
    # pooled is stored in bf16 (activation dtype) -> compare at bf16 tolerance.
    assert jnp.allclose(pooled.astype(jnp.float32), pooled_ref, atol=1e-2, rtol=1e-2)

    print("KERNEL_OK")
</pallas_src>

<mosaic_0001>
module attributes {stable_mosaic.version = 11 : i64} {
  func.func @kernel(%arg0: i32, %arg1: memref<16x128xbf16, #tpu.memory_space<vmem>>, %arg2: memref<128x128xbf16, #tpu.memory_space<vmem>>, %arg3: memref<1x128xf32, #tpu.memory_space<vmem>>, %arg4: memref<128x32xbf16, #tpu.memory_space<vmem>>, %arg5: memref<1x32xf32, #tpu.memory_space<vmem>>, %arg6: memref<32x128xbf16, #tpu.memory_space<vmem>>, %arg7: memref<1x128xf32, #tpu.memory_space<vmem>>, %arg8: memref<16x128xf32, #tpu.memory_space<vmem>>) attributes {dimension_semantics = [#tpu.dimension_semantics<parallel>], iteration_bounds = array<i64: 1>, scalar_prefetch = 0 : i64, scratch_operands = 0 : i64, tpu.core_type = #tpu.core_type<tc>, window_params = [{transform_indices = @transform_0, window_bounds = array<i64: 16, 128>}, {pipeline_mode = #tpu.pipeline_mode<synchronous>, transform_indices = @transform_1, window_bounds = array<i64: 128, 128>}, {pipeline_mode = #tpu.pipeline_mode<synchronous>, transform_indices = @transform_2, window_bounds = array<i64: 1, 128>}, {pipeline_mode = #tpu.pipeline_mode<synchronous>, transform_indices = @transform_3, window_bounds = array<i64: 128, 32>}, {pipeline_mode = #tpu.pipeline_mode<synchronous>, transform_indices = @transform_4, window_bounds = array<i64: 1, 32>}, {pipeline_mode = #tpu.pipeline_mode<synchronous>, transform_indices = @transform_5, window_bounds = array<i64: 32, 128>}, {pipeline_mode = #tpu.pipeline_mode<synchronous>, transform_indices = @transform_6, window_bounds = array<i64: 1, 128>}, {transform_indices = @transform_7, window_bounds = array<i64: 16, 128>}]} {
    %c0 = arith.constant 0 : index
    %c0_0 = arith.constant 0 : index
    %0 = vector.load %arg1[%c0, %c0_0] : memref<16x128xbf16, #tpu.memory_space<vmem>>, vector<16x128xbf16>
    %c0_1 = arith.constant 0 : index
    %c0_2 = arith.constant 0 : index
    %1 = vector.load %arg2[%c0_1, %c0_2] : memref<128x128xbf16, #tpu.memory_space<vmem>>, vector<128x128xbf16>
    %cst = arith.constant dense<0.000000e+00> : vector<16x128xf32>
    %2 = tpu.matmul %0, %1, %cst {dimension_numbers = #tpu.dot_dimension_numbers<[1], [0], [0], [1], [0, 0, 1, 1], [], []>} : vector<16x128xbf16>, vector<128x128xbf16>, vector<16x128xf32> -> vector<16x128xf32>
    %c0_3 = arith.constant 0 : index
    %c0_4 = arith.constant 0 : index
    %3 = vector.load %arg3[%c0_3, %c0_4] : memref<1x128xf32, #tpu.memory_space<vmem>>, vector<1x128xf32>
    %4 = vector.broadcast %3 : vector<1x128xf32> to vector<16x128xf32>
    %5 = arith.addf %2, %4 : vector<16x128xf32>
    %6 = math.tanh %5 : vector<16x128xf32>
    %7 = arith.truncf %6 : vector<16x128xf32> to vector<16x128xbf16>
    %c0_5 = arith.constant 0 : index
    %c0_6 = arith.constant 0 : index
    %8 = vector.load %arg4[%c0_5, %c0_6] : memref<128x32xbf16, #tpu.memory_space<vmem>>, vector<128x32xbf16>
    %cst_7 = arith.constant dense<0.000000e+00> : vector<16x32xf32>
    %9 = tpu.matmul %7, %8, %cst_7 {dimension_numbers = #tpu.dot_dimension_numbers<[1], [0], [0], [1], [0, 0, 1, 1], [], []>} : vector<16x128xbf16>, vector<128x32xbf16>, vector<16x32xf32> -> vector<16x32xf32>
    %c0_8 = arith.constant 0 : index
    %c0_9 = arith.constant 0 : index
    %10 = vector.load %arg5[%c0_8, %c0_9] : memref<1x32xf32, #tpu.memory_space<vmem>>, vector<1x32xf32>
    %11 = vector.broadcast %10 : vector<1x32xf32> to vector<16x32xf32>
    %12 = arith.addf %9, %11 : vector<16x32xf32>
    %13 = math.tanh %12 : vector<16x32xf32>
    %14 = arith.truncf %13 : vector<16x32xf32> to vector<16x32xbf16>
    %c0_10 = arith.constant 0 : index
    %c0_11 = arith.constant 0 : index
    %15 = vector.load %arg6[%c0_10, %c0_11] : memref<32x128xbf16, #tpu.memory_space<vmem>>, vector<32x128xbf16>
    %cst_12 = arith.constant dense<0.000000e+00> : vector<16x128xf32>
    %16 = tpu.matmul %14, %15, %cst_12 {dimension_numbers = #tpu.dot_dimension_numbers<[1], [0], [0], [1], [0, 0, 1, 1], [], []>} : vector<16x32xbf16>, vector<32x128xbf16>, vector<16x128xf32> -> vector<16x128xf32>
    %c0_13 = arith.constant 0 : index
    %c0_14 = arith.constant 0 : index
    %17 = vector.load %arg7[%c0_13, %c0_14] : memref<1x128xf32, #tpu.memory_space<vmem>>, vector<1x128xf32>
    %18 = vector.broadcast %17 : vector<1x128xf32> to vector<16x128xf32>
    %19 = arith.addf %16, %18 : vector<16x128xf32>
    %c0_15 = arith.constant 0 : index
    %c0_16 = arith.constant 0 : index
    %20 = vector.load %arg8[%c0_15, %c0_16] : memref<16x128xf32, #tpu.memory_space<vmem>>, vector<16x128xf32>
    tpu.vector_store %arg8[%c0_15, %c0_16], %19 {strides = array<i32>} : memref<16x128xf32, #tpu.memory_space<vmem>>, vector<16x128xf32>,
    return
  }
  func.func @transform_0(%arg0: i32) -> (i32, i32) {
    %c0_i32 = arith.constant 0 : i32
    %c0_i32_0 = arith.constant 0 : i32
    return %arg0, %c0_i32 : i32, i32
  }
  func.func @transform_1(%arg0: i32) -> (i32, i32) {
    %c0_i32 = arith.constant 0 : i32
    %c0_i32_0 = arith.constant 0 : i32
    %c0_i32_1 = arith.constant 0 : i32
    return %c0_i32, %c0_i32_0 : i32, i32
  }
  func.func @transform_2(%arg0: i32) -> (i32, i32) {
    %c0_i32 = arith.constant 0 : i32
    %c0_i32_0 = arith.constant 0 : i32
    %c0_i32_1 = arith.constant 0 : i32
    return %c0_i32, %c0_i32_0 : i32, i32
  }
  func.func @transform_3(%arg0: i32) -> (i32, i32) {
    %c0_i32 = arith.constant 0 : i32
    %c0_i32_0 = arith.constant 0 : i32
    %c0_i32_1 = arith.constant 0 : i32
    return %c0_i32, %c0_i32_0 : i32, i32
  }
  func.func @transform_4(%arg0: i32) -> (i32, i32) {
    %c0_i32 = arith.constant 0 : i32
    %c0_i32_0 = arith.constant 0 : i32
    %c0_i32_1 = arith.constant 0 : i32
    return %c0_i32, %c0_i32_0 : i32, i32
  }
  func.func @transform_5(%arg0: i32) -> (i32, i32) {
    %c0_i32 = arith.constant 0 : i32
    %c0_i32_0 = arith.constant 0 : i32
    %c0_i32_1 = arith.constant 0 : i32
    return %c0_i32, %c0_i32_0 : i32, i32
  }
  func.func @transform_6(%arg0: i32) -> (i32, i32) {
    %c0_i32 = arith.constant 0 : i32
    %c0_i32_0 = arith.constant 0 : i32
    %c0_i32_1 = arith.constant 0 : i32
    return %c0_i32, %c0_i32_0 : i32, i32
  }
  func.func @transform_7(%arg0: i32) -> (i32, i32) {
    %c0_i32 = arith.constant 0 : i32
    %c0_i32_0 = arith.constant 0 : i32
    return %arg0, %c0_i32 : i32, i32
  }
}

</mosaic_0001>

<llo_original>
// kernel: text_classifier_no_aux.1
$region0: #{text_classifier_no_aux.1}
  #allocation0 [shape = 'u32[]', space=smem, size = 0x4, offset = 0x4, fixed_abs, tag = 'smem constant byte address 0x4 - core index']
  #allocation1 [shape = 'u32[144,128]{1,0:T(1,128)}', space=vmem, size = 0x12000, scoped, tag = 'internal scratch']
  %s0 = inlined_call_operand.vmem [shape: bf16[2,1024], index: 0, kind: input, shape index: {}]
  %s1 = inlined_call_operand.vmem [shape: bf16[128,128], index: 1, kind: input, shape index: {}]
  %s2 = inlined_call_operand.vmem [shape: f32[1,128], index: 2, kind: input, shape index: {}]
  %s3 = inlined_call_operand.vmem [shape: bf16[128,32], index: 3, kind: input, shape index: {}]
  %s4 = inlined_call_operand.vmem [shape: f32[1,32], index: 4, kind: input, shape index: {}]
  %s5 = inlined_call_operand.vmem [shape: bf16[32,128], index: 5, kind: input, shape index: {}]
  %s6 = inlined_call_operand.vmem [shape: f32[1,128], index: 6, kind: input, shape index: {}]
  %s7 = inlined_call_operand.hbm [shape: f32[2,128], index: 7, kind: output, shape index: {}]
  %s8 = sld [smem:[#allocation0]]
  $region72: #{text_classifier_no_aux.1} parent=0
    _
  %s10 = ssub.s32 1, %s8
  %s11 = scalar_select 0, %s10, %s8
  $region1: #{text_classifier_no_aux.1} parent=0
    #allocation2 [shape = 'u8[4096]{0}', space=vmem, size = 0x1000, scoped, tag = 'input window, operand 0, single buffered']
    #allocation3 [shape = 'u8[8192]{0}', space=vmem, size = 0x2000, scoped, tag = 'output window, operand 0, single buffered']
    #allocation4 [shape = 's32[1]{0}', space=sflag, size = 0x4, scoped, tag = 'scoped memory for text_classifier_no_aux.1']
    %12 = vsyncpa [#allocation4], 0
    // Predicated region
    $region2: #{text_classifier_no_aux.1} parent=1 // pred_check
      _
    $region3: #{text_classifier_no_aux.1} parent=1 // pred_check_branch
      %14 = sbr.rel (0) target = $region5
    $region4: #{text_classifier_no_aux.1} parent=1 // pred_region
      // Predicated region
      $region6: #{text_classifier_no_aux.1} parent=4 // pred_check
        _
      $region7: #{text_classifier_no_aux.1} parent=4 // pred_check_branch
        %16 = sbr.rel (0) target = $region9
      $region8: #{text_classifier_no_aux.1} parent=4 // pred_region
        // Predicated region
        $region10: #{text_classifier_no_aux.1} parent=8 // pred_check
          _
        $region11: #{text_classifier_no_aux.1} parent=8 // pred_check_branch
          %18 = sbr.rel target = $region13
        $region12: #{text_classifier_no_aux.1} parent=8 // pred_region
          // Predicated region
          $region25: #{text_classifier_no_aux.1} parent=12 // pred_check
            _
          $region26: #{text_classifier_no_aux.1} parent=12 // pred_check_branch
            %33 = sbr.rel (0) target = $region28
          $region27: #{text_classifier_no_aux.1} parent=12 // pred_region
            loop: start=0, step=1, limit=1
            $region29: #{text_classifier_no_aux.1} parent=27 // loop_pre_header
              _
            $region30: #{text_classifier_no_aux.1} parent=27 // loop_header
              %s36 = sphi 0, %s40
              %p37 = scmp.ge.s32.totalorder %s36, 1
              %s41 = sphi %s0, %s0
              %s42 = sphi [#allocation2], [#allocation2]
            $region31: #{text_classifier_no_aux.1} parent=27 // loop_header_branch
              %39 = sbr.rel (%p37) target = $region35
            $region32: #{text_classifier_no_aux.1} parent=27 // loop_body
              %v43 = vld [vmem:[%s41] sm:$0x1]
              %44 = vst [vmem:[%s42] sm:$0x1] %v43
            $region33: #{text_classifier_no_aux.1} parent=27 // loop_footer
              %s40 = sadd.s32 1, %s36
            $region34: #{text_classifier_no_aux.1} parent=27 // loop_footer_branch
              %35 = sbr.rel target = $region30
            $region35: #{text_classifier_no_aux.1} parent=27 // loop_exit
              _
          $region28: #{text_classifier_no_aux.1} parent=12 // pred_fallthru
            _
        $region13: #{text_classifier_no_aux.1} parent=8 // pred_fallthru
          _
        // Predicated region
        $region14: #{text_classifier_no_aux.1} parent=8 // pred_check
          _
        $region15: #{text_classifier_no_aux.1} parent=8 // pred_check_branch
          %20 = sbr.rel (0) target = $region17
        $region16: #{text_classifier_no_aux.1} parent=8 // pred_region
          loop: start=0, step=1, limit=1
          $region18: #{text_classifier_no_aux.1} parent=16 // loop_pre_header
            _
          $region19: #{text_classifier_no_aux.1} parent=16 // loop_header
            %s23 = sphi 0, %s27
            %p24 = scmp.ge.s32.totalorder %s23, 1
            %s28 = sphi %s0, %s0
            %s29 = sphi [#allocation2], [#allocation2]
          $region20: #{text_classifier_no_aux.1} parent=16 // loop_header_branch
            %26 = sbr.rel (%p24) target = $region24
          $region21: #{text_classifier_no_aux.1} parent=16 // loop_body
            %v30 = vld [vmem:[%s28] sm:$0x1]
            %31 = vst [vmem:[%s29] sm:$0x1] %v30
          $region22: #{text_classifier_no_aux.1} parent=16 // loop_footer
            %s27 = sadd.s32 1, %s23
          $region23: #{text_classifier_no_aux.1} parent=16 // loop_footer_branch
            %22 = sbr.rel target = $region19
          $region24: #{text_classifier_no_aux.1} parent=16 // loop_exit
            _
        $region17: #{text_classifier_no_aux.1} parent=8 // pred_fallthru
          _
      $region9: #{text_classifier_no_aux.1} parent=4 // pred_fallthru
        _
      %45 = vnop
    $region5: #{text_classifier_no_aux.1} parent=1 // pred_fallthru
      _
    // Predicated region
    $region36: #{text_classifier_no_aux.1} parent=1 // pred_check
      _
    $region37: #{text_classifier_no_aux.1} parent=1 // pred_check_branch
      %47 = sbr.rel (0) target = $region39
    $region38: #{text_classifier_no_aux.1} parent=1 // pred_region
      _
    $region39: #{text_classifier_no_aux.1} parent=1 // pred_fallthru
      _
    // Predicated region
    $region40: #{text_classifier_no_aux.1} parent=1 // pred_check
      _
    $region41: #{text_classifier_no_aux.1} parent=1 // pred_check_branch
      %49 = sbr.rel (0) target = $region43
    $region42: #{text_classifier_no_aux.1} parent=1 // pred_region
      _
    $region43: #{text_classifier_no_aux.1} parent=1 // pred_fallthru
      _
    // Predicated region
    $region44: #{text_classifier_no_aux.1} parent=1 // pred_check
      _
    $region45: #{text_classifier_no_aux.1} parent=1 // pred_check_branch
      %51 = sbr.rel (0) target = $region47
    $region46: #{text_classifier_no_aux.1} parent=1 // pred_region
      _
    $region47: #{text_classifier_no_aux.1} parent=1 // pred_fallthru
      _
    // Predicated region
    $region48: #{text_classifier_no_aux.1} parent=1 // pred_check
      _
    $region49: #{text_classifier_no_aux.1} parent=1 // pred_check_branch
      %53 = sbr.rel (0) target = $region51
    $region50: #{text_classifier_no_aux.1} parent=1 // pred_region
      _
    $region51: #{text_classifier_no_aux.1} parent=1 // pred_fallthru
      _
    // Predicated region
    $region52: #{text_classifier_no_aux.1} parent=1 // pred_check
      _
    $region53: #{text_classifier_no_aux.1} parent=1 // pred_check_branch
      %55 = sbr.rel (0) target = $region55
    $region54: #{text_classifier_no_aux.1} parent=1 // pred_region
      _
    $region55: #{text_classifier_no_aux.1} parent=1 // pred_fallthru
      _
    // Predicated region
    $region56: #{text_classifier_no_aux.1} parent=1 // pred_check
      _
    $region57: #{text_classifier_no_aux.1} parent=1 // pred_check_branch
      %57 = sbr.rel (0) target = $region59
    $region58: #{text_classifier_no_aux.1} parent=1 // pred_region
      _
    $region59: #{text_classifier_no_aux.1} parent=1 // pred_fallthru
      _
    // Predicated region
    $region60: #{text_classifier_no_aux.1} parent=1 // pred_check
      _
    $region61: #{text_classifier_no_aux.1} parent=1 // pred_check_branch
      %59 = sbr.rel (0) target = $region63
    $region62: #{text_classifier_no_aux.1} parent=1 // pred_region
      _
    $region63: #{text_classifier_no_aux.1} parent=1 // pred_fallthru
      _
    %v61 = vld [vmem:[#allocation2] sm:$0x1]
    %v62 = vld [vmem:[#allocation2 + $0x1] sm:$0x1]
    %v63 = vld [vmem:[#allocation2 + $0x2] sm:$0x1]
    %v64 = vld [vmem:[#allocation2 + $0x3] sm:$0x1]
    %v65 = vld [vmem:[#allocation2 + $0x4] sm:$0x1]
    %v66 = vld [vmem:[#allocation2 + $0x5] sm:$0x1]
    %v67 = vld [vmem:[#allocation2 + $0x6] sm:$0x1]
    %v68 = vld [vmem:[#allocation2 + $0x7] sm:$0x1]
    %v69 = vld [vmem:[%s1] sm:$0xf]
    %v70 = vld [vmem:[%s1 + $0x4] sm:$0xf]
    %v71 = vld [vmem:[%s1 + $0x8] sm:$0xf]
    %v72 = vld [vmem:[%s1 + $0xc] sm:$0xf]
    %v73 = vld [vmem:[%s1 + $0x10] sm:$0xf]
    %v74 = vld [vmem:[%s1 + $0x14] sm:$0xf]
    %v75 = vld [vmem:[%s1 + $0x18] sm:$0xf]
    %v76 = vld [vmem:[%s1 + $0x1c] sm:$0xf]
    %v77 = vld [vmem:[%s1 + $0x20] sm:$0xf]
    %v78 = vld [vmem:[%s1 + $0x24] sm:$0xf]
    %v79 = vld [vmem:[%s1 + $0x28] sm:$0xf]
    %v80 = vld [vmem:[%s1 + $0x2c] sm:$0xf]
    %v81 = vld [vmem:[%s1 + $0x30] sm:$0xf]
    %v82 = vld [vmem:[%s1 + $0x34] sm:$0xf]
    %v83 = vld [vmem:[%s1 + $0x38] sm:$0xf]
    %v84 = vld [vmem:[%s1 + $0x3c] sm:$0xf]
    %v85 = vld [vmem:[%s2] sm:$0x1]
    %v87 = vlaneseq
    %v88 = vshrl.u32 %v87, 7
    %v89 = vsub.s32 0, %v88
    %v90 = vrot.slane %v85, %v89
    %v100 = vcombine.low %v61, %v62
    %v101 = vcombine.low %v63, %v64
    %v102 = vcombine.low %v65, %v66
    %v103 = vcombine.low %v67, %v68
    %v105 = vunpack.c.l.s4 1966171168
    %v106 = vunpack.c.0.s8 %v105
    %v107 = vlaneseq
    %v108 = vshrl.u32 %v107, 7
    %v109 = vsub.s32 %v106, %v108
    %v110 = vrot.slane %v100, %v109
    %v112 = vunpack.c.l.s4 1966171168
    %v113 = vunpack.c.0.s8 %v112
    %v114 = vlaneseq
    %v115 = vshrl.u32 %v114, 7
    %v116 = vsub.s32 %v113, %v115
    %v117 = vrot.slane %v101, %v116
    %v119 = vunpack.c.l.s4 1966171168
    %v120 = vunpack.c.0.s8 %v119
    %v121 = vlaneseq
    %v122 = vshrl.u32 %v121, 7
    %v123 = vsub.s32 %v120, %v122
    %v124 = vrot.slane %v102, %v123
    %v126 = vunpack.c.l.s4 1966171168
    %v127 = vunpack.c.0.s8 %v126
    %v128 = vlaneseq
    %v129 = vshrl.u32 %v128, 7
    %v130 = vsub.s32 %v127, %v129
    %v131 = vrot.slane %v103, %v130
    %v132 = vcombine.low %v110, %v117
    %v133 = vcombine.low %v124, %v131
    %v135 = vunpack.c.l.s4 1966171168
    %v136 = vunpack.c.0.s8 %v135
    %v137 = vlaneseq
    %v138 = vshrl.u32 %v137, 7
    %v139 = vsub.s32 %v136, %v138
    %v140 = vrot.slane %v132, %v139
    %v142 = vunpack.c.l.s4 1966171168
    %v143 = vunpack.c.0.s8 %v142
    %v144 = vlaneseq
    %v145 = vshrl.u32 %v144, 7
    %v146 = vsub.s32 %v143, %v145
    %v147 = vrot.slane %v133, %v146
    %v148 = vcombine.low %v140, %v147
    %v166 = vunpack.c.l.b16 %v69
    %v167 = vunpack.c.l.b16 %v70
    %v168 = vunpack.c.l.b16 %v71
    %v169 = vunpack.c.l.b16 %v72
    %v170 = vunpack.c.l.b16 %v73
    %v171 = vunpack.c.l.b16 %v74
    %v172 = vunpack.c.l.b16 %v75
    %v173 = vunpack.c.l.b16 %v76
    %v174 = vunpack.c.l.b16 %v77
    %v175 = vunpack.c.l.b16 %v78
    %v176 = vunpack.c.l.b16 %v79
    %v177 = vunpack.c.l.b16 %v80
    %v178 = vunpack.c.l.b16 %v81
    %v179 = vunpack.c.l.b16 %v82
    %v180 = vunpack.c.l.b16 %v83
    %v181 = vunpack.c.l.b16 %v84
    %v182 = vpack.c.b16 %v167, %v166
    %v183 = vpack.c.b16 %v169, %v168
    %v184 = vpack.c.b16 %v171, %v170
    %v185 = vpack.c.b16 %v173, %v172
    %v186 = vpack.c.b16 %v175, %v174
    %v187 = vpack.c.b16 %v177, %v176
    %v188 = vpack.c.b16 %v179, %v178
    %v189 = vpack.c.b16 %v181, %v180
    %198 = vmatprep.subr.bf16.mxu0 0
    %199 = vmatpush1.bf16.msra.mxu0 %v182
    %200 = vmatprep.subr.bf16.mxu0 0
    %201 = vmatpush1.bf16.msra.mxu0 %v183
    %202 = vmatprep.subr.bf16.mxu0 0
    %203 = vmatpush1.bf16.msra.mxu0 %v184
    %204 = vmatprep.subr.bf16.mxu0 0
    %205 = vmatpush1.bf16.msra.mxu0 %v185
    %206 = vmatprep.subr.bf16.mxu0 0
    %207 = vmatpush1.bf16.msra.mxu0 %v186
    %208 = vmatprep.subr.bf16.mxu0 0
    %209 = vmatpush1.bf16.msra.mxu0 %v187
    %210 = vmatprep.subr.bf16.mxu0 0
    %211 = vmatpush1.bf16.msra.mxu0 %v188
    %212 = vmatprep.subr.bf16.mxu0 0
    %213 = vmatpush1.bf16.msra.mxu0 %v189
    %214 = vmatprep.subr.bf16.mxu0 0
    %215 = vmatpush1.bf16.msra.mxu0 0
    %216 = vmatprep.subr.bf16.mxu0 0
    %217 = vmatpush1.bf16.msra.mxu0 0
    %218 = vmatprep.subr.bf16.mxu0 0
    %219 = vmatpush1.bf16.msra.mxu0 0
    %220 = vmatprep.subr.bf16.mxu0 0
    %221 = vmatpush1.bf16.msra.mxu0 0
    %222 = vmatprep.subr.bf16.mxu0 0
    %223 = vmatpush1.bf16.msra.mxu0 0
    %224 = vmatprep.subr.bf16.mxu0 0
    %225 = vmatpush1.bf16.msra.mxu0 0
    %226 = vmatprep.subr.bf16.mxu0 0
    %227 = vmatpush1.bf16.msra.mxu0 0
    %228 = vmatprep.subr.bf16.mxu0 0
    %229 = vmatpush1.bf16.msra.mxu0 0
    %230 = vmatprep.mubr.bf16.mxu0 0
    %231 = vmatmul.mubr.bf16.gmra.mrb[0].mxu0 %v148
    %v232 = vpop.f32.mrb[0].mxu0
    %v233 = vadd.f32 %v90, %v232
    %v234 = vpop.f32.mrb[0].mxu0
    %v235 = vpop.f32.mrb[0].mxu0
    %v236 = vadd.f32 %v90, %v235
    %v237 = vpop.f32.mrb[0].mxu0
    %238 = vdwg.mxu0
    %v239 = vtanh.pop %v233
    %v240 = vtanh.pop %v236
    %v241 = vpack.c.bf16 %v240, %v239
    %v242 = vld [vmem:[%s3] sm:$0xf]
    %v243 = vld [vmem:[%s3 + $0x4] sm:$0xf]
    %v244 = vld [vmem:[%s3 + $0x8] sm:$0xf]
    %v245 = vld [vmem:[%s3 + $0xc] sm:$0xf]
    %v246 = vld [vmem:[%s3 + $0x10] sm:$0xf]
    %v247 = vld [vmem:[%s3 + $0x14] sm:$0xf]
    %v248 = vld [vmem:[%s3 + $0x18] sm:$0xf]
    %v249 = vld [vmem:[%s3 + $0x1c] sm:$0xf]
    %v250 = vld [vmem:[%s3 + $0x20] sm:$0xf]
    %v251 = vld [vmem:[%s3 + $0x24] sm:$0xf]
    %v252 = vld [vmem:[%s3 + $0x28] sm:$0xf]
    %v253 = vld [vmem:[%s3 + $0x2c] sm:$0xf]
    %v254 = vld [vmem:[%s3 + $0x30] sm:$0xf]
    %v255 = vld [vmem:[%s3 + $0x34] sm:$0xf]
    %v256 = vld [vmem:[%s3 + $0x38] sm:$0xf]
    %v257 = vld [vmem:[%s3 + $0x3c] sm:$0xf]
    %v258 = vld [vmem:[%s4] sm:$0x1]
    %v260 = vlaneseq
    %v261 = vshrl.u32 %v260, 7
    %v262 = vsub.s32 0, %v261
    %v263 = vrot.slane %v258, %v262
    %v281 = vunpack.c.l.b16 %v242
    %v282 = vunpack.c.l.b16 %v243
    %v283 = vunpack.c.l.b16 %v244
    %v284 = vunpack.c.l.b16 %v245
    %v285 = vunpack.c.l.b16 %v246
    %v286 = vunpack.c.l.b16 %v247
    %v287 = vunpack.c.l.b16 %v248
    %v288 = vunpack.c.l.b16 %v249
    %v289 = vunpack.c.l.b16 %v250
    %v290 = vunpack.c.l.b16 %v251
    %v291 = vunpack.c.l.b16 %v252
    %v292 = vunpack.c.l.b16 %v253
    %v293 = vunpack.c.l.b16 %v254
    %v294 = vunpack.c.l.b16 %v255
    %v295 = vunpack.c.l.b16 %v256
    %v296 = vunpack.c.l.b16 %v257
    %v297 = vpack.c.b16 %v282, %v281
    %v298 = vpack.c.b16 %v284, %v283
    %v299 = vpack.c.b16 %v286, %v285
    %v300 = vpack.c.b16 %v288, %v287
    %v301 = vpack.c.b16 %v290, %v289
    %v302 = vpack.c.b16 %v292, %v291
    %v303 = vpack.c.b16 %v294, %v293
    %v304 = vpack.c.b16 %v296, %v295
    %313 = vmatprep.subr.bf16.mxu0 0
    %314 = vmatpush1.bf16.msra.mxu0 %v297
    %315 = vmatprep.subr.bf16.mxu0 0
    %316 = vmatpush1.bf16.msra.mxu0 %v298
    %317 = vmatprep.subr.bf16.mxu0 0
    %318 = vmatpush1.bf16.msra.mxu0 %v299
    %319 = vmatprep.subr.bf16.mxu0 0
    %320 = vmatpush1.bf16.msra.mxu0 %v300
    %321 = vmatprep.subr.bf16.mxu0 0
    %322 = vmatpush1.bf16.msra.mxu0 %v301
    %323 = vmatprep.subr.bf16.mxu0 0
    %324 = vmatpush1.bf16.msra.mxu0 %v302
    %325 = vmatprep.subr.bf16.mxu0 0
    %326 = vmatpush1.bf16.msra.mxu0 %v303
    %327 = vmatprep.subr.bf16.mxu0 0
    %328 = vmatpush1.bf16.msra.mxu0 %v304
    %329 = vmatprep.subr.bf16.mxu0 0
    %330 = vmatpush1.bf16.msra.mxu0 0
    %331 = vmatprep.subr.bf16.mxu0 0
    %332 = vmatpush1.bf16.msra.mxu0 0
    %333 = vmatprep.subr.bf16.mxu0 0
    %334 = vmatpush1.bf16.msra.mxu0 0
    %335 = vmatprep.subr.bf16.mxu0 0
    %336 = vmatpush1.bf16.msra.mxu0 0
    %337 = vmatprep.subr.bf16.mxu0 0
    %338 = vmatpush1.bf16.msra.mxu0 0
    %339 = vmatprep.subr.bf16.mxu0 0
    %340 = vmatpush1.bf16.msra.mxu0 0
    %341 = vmatprep.subr.bf16.mxu0 0
    %342 = vmatpush1.bf16.msra.mxu0 0
    %343 = vmatprep.subr.bf16.mxu0 0
    %344 = vmatpush1.bf16.msra.mxu0 0
    %345 = vmatprep.mubr.bf16.mxu0 0
    %346 = vmatmul.mubr.bf16.gmra.mrb[0].mxu0 %v241
    %v347 = vpop.f32.mrb[0].mxu0
    %v348 = vadd.f32 %v263, %v347
    %v349 = vpop.f32.mrb[0].mxu0
    %v350 = vpop.f32.mrb[0].mxu0
    %v351 = vadd.f32 %v263, %v350
    %v352 = vpop.f32.mrb[0].mxu0
    %353 = vdwg.mxu0
    %v354 = vtanh.pop %v348
    %v355 = vtanh.pop %v351
    %v356 = vpack.c.bf16 %v355, %v354
    %v357 = vld [vmem:[%s5] sm:$0xf]
    %v358 = vld [vmem:[%s5 + $0x4] sm:$0xf]
    %v359 = vld [vmem:[%s5 + $0x8] sm:$0xf]
    %v360 = vld [vmem:[%s5 + $0xc] sm:$0xf]
    %v361 = vld [vmem:[%s6] sm:$0x1]
    %v363 = vlaneseq
    %v364 = vshrl.u32 %v363, 7
    %v365 = vsub.s32 0, %v364
    %v366 = vrot.slane %v361, %v365
    %v372 = vunpack.c.l.b16 %v357
    %v373 = vunpack.c.l.b16 %v358
    %v374 = vunpack.c.l.b16 %v359
    %v375 = vunpack.c.l.b16 %v360
    %v376 = vpack.c.b16 %v373, %v372
    %v377 = vpack.c.b16 %v375, %v374
    %vm380 = vcmask 261120
    %v382 = vsel %vm380, %v356, 0
    %384 = vmatprep.subr.bf16.mxu0 0
    %385 = vmatpush1.bf16.msra.mxu0 %v376
    %386 = vmatprep.subr.bf16.mxu0 0
    %387 = vmatpush1.bf16.msra.mxu0 %v377
    %388 = vmatprep.subr.bf16.mxu0 0
    %389 = vmatpush1.bf16.msra.mxu0 0
    %390 = vmatprep.subr.bf16.mxu0 0
    %391 = vmatpush1.bf16.msra.mxu0 0
    %392 = vmatprep.subr.bf16.mxu0 0
    %393 = vmatpush1.bf16.msra.mxu0 0
    %394 = vmatprep.subr.bf16.mxu0 0
    %395 = vmatpush1.bf16.msra.mxu0 0
    %396 = vmatprep.subr.bf16.mxu0 0
    %397 = vmatpush1.bf16.msra.mxu0 0
    %398 = vmatprep.subr.bf16.mxu0 0
    %399 = vmatpush1.bf16.msra.mxu0 0
    %400 = vmatprep.subr.bf16.mxu0 0
    %401 = vmatpush1.bf16.msra.mxu0 0
    %402 = vmatprep.subr.bf16.mxu0 0
    %403 = vmatpush1.bf16.msra.mxu0 0
    %404 = vmatprep.subr.bf16.mxu0 0
    %405 = vmatpush1.bf16.msra.mxu0 0
    %406 = vmatprep.subr.bf16.mxu0 0
    %407 = vmatpush1.bf16.msra.mxu0 0
    %408 = vmatprep.subr.bf16.mxu0 0
    %409 = vmatpush1.bf16.msra.mxu0 0
    %410 = vmatprep.subr.bf16.mxu0 0
    %411 = vmatpush1.bf16.msra.mxu0 0
    %412 = vmatprep.subr.bf16.mxu0 0
    %413 = vmatpush1.bf16.msra.mxu0 0
    %414 = vmatprep.subr.bf16.mxu0 0
    %415 = vmatpush1.bf16.msra.mxu0 0
    %416 = vmatprep.mubr.bf16.mxu0 0
    %417 = vmatmul.mubr.bf16.gmra.mrb[0].mxu0 %v382
    %v418 = vpop.f32.mrb[0].mxu0
    %v419 = vadd.f32 %v366, %v418
    %v420 = vpop.f32.mrb[0].mxu0
    %v421 = vpop.f32.mrb[0].mxu0
    %v422 = vadd.f32 %v366, %v421
    %v423 = vpop.f32.mrb[0].mxu0
    %424 = vdwg.mxu0
    %425 = vst [vmem:[#allocation3] sm:$0xff] %v419
    %426 = vst [vmem:[#allocation3 + $0x8] sm:$0xff] %v422
    // Predicated region
    $region64: #{text_classifier_no_aux.1} parent=1 // pred_check
      _
    $region65: #{text_classifier_no_aux.1} parent=1 // pred_check_branch
      %428 = sbr.rel (0) target = $region67
    $region66: #{text_classifier_no_aux.1} parent=1 // pred_region
      %s430 = ssub.s32 256, 32
      %431 = vsyncadd [#allocation4], %s430
      %s432 = sshll.u32 [#allocation3], 4
      %s433 = int_to_ptr.vmem [resolvable:$true] %s432
      %438 = dma.vmem_to_hbm [thread:$0]  %s433, 32, %s7, [#allocation4], 32, 32, 2
    $region67: #{text_classifier_no_aux.1} parent=1 // pred_fallthru
      _
    // Predicated region
    $region68: #{text_classifier_no_aux.1} parent=1 // pred_check
      _
    $region69: #{text_classifier_no_aux.1} parent=1 // pred_check_branch
      %440 = sbr.rel (0) target = $region71
    $region70: #{text_classifier_no_aux.1} parent=1 // pred_region
      %441 = dma.done [#allocation4], 256
    $region71: #{text_classifier_no_aux.1} parent=1 // pred_fallthru
      _
    %442 = vsyncpa [#allocation4], 1

</llo_original>
